<compile_context>
chip_gen: v7x
topology: tpu7x:2x2x1
jax: 0.10.0
libtpu: 0.0.40
codegen_flags: <defaults>
</compile_context>

<pallas_src>
import functools

import jax
import jax.numpy as jnp
from jax.experimental import pallas as pl
from jax.experimental.pallas import tpu as pltpu


def _round_up(x, m):
    return ((x + m - 1) // m) * m


def _dropout_linear_kernel(seed_ref, x_ref, w_ref, b_ref, o_ref, acc_ref, *,
                           p, apply_relu, out_cols):
    # --- All pallas index/scalar primitives at kernel top level. -------------
    # (They must NOT be bound inside pl.when bodies: those become lax.cond
    #  branch jaxprs and program_id has no lowering there in interpret mode.)
    i = pl.program_id(0)
    j = pl.program_id(1)
    k = pl.program_id(2)
    k_last = pl.num_programs(2) - 1
    seed = seed_ref[0]

    bm, bn = acc_ref.shape
    row0 = i * bm
    col0 = j * bn

    @pl.when(k == 0)
    def _():
        acc_ref[...] = jnp.zeros_like(acc_ref)

    # bf16 operands (cast in the wrapper), f32 accumulation on the MXU.
    acc_ref[...] += jnp.dot(x_ref[...], w_ref[...],
                            preferred_element_type=jnp.float32)

    # Epilogue: bias + dropout + ReLU + store, once per output tile.
    @pl.when(k == k_last)
    def _():
        y = acc_ref[...] + b_ref[...]          # (bm, bn) + (1, bn)

        if p >= 1.0:
            y = jnp.zeros_like(y)
        elif p > 0.0:
            # Counter-based PRNG: lowbias32(hash of (seed, global element id)).
            # Row term is a (bm,1) vector (one multiply per row), column term a
            # (1,bn) vector; only the broadcast-add + mixer are per-element.
            rows = row0 + jax.lax.broadcasted_iota(jnp.int32, (bm, 1), 0)
            cols = col0 + jax.lax.broadcasted_iota(jnp.int32, (1, bn), 1)
            row_part = rows.astype(jnp.uint32) * jnp.uint32(out_cols)
            elem = row_part + cols.astype(jnp.uint32)       # (bm, bn) uint32
            seed_mix = seed.astype(jnp.uint32) * jnp.uint32(0x9E3779B9)
            h = elem ^ seed_mix
            h = h ^ (h >> 16)
            h = h * jnp.uint32(0x7FEB352D)
            h = h ^ (h >> 15)
            h = h * jnp.uint32(0x846CA68B)
            h = h ^ (h >> 16)
            bits24 = (h >> 8).astype(jnp.int32)             # uniform on [0, 2^24)
            thresh = jnp.int32(min(int(p * (1 << 24)), (1 << 24) - 1))
            scale = jnp.float32(1.0 / (1.0 - p))
            # keep with prob (1-p); survivors scaled by 1/(1-p).
            y = y * jnp.where(bits24 >= thresh, scale, jnp.float32(0.0))

        if apply_relu:
            y = jnp.maximum(y, 0.0)

        o_ref[...] = y.astype(o_ref.dtype)


def dropout_linear(x, weight, bias, seed, *, p=0.5, apply_relu=True,
                   bm=256, bn=512, bk=512, out_dtype=jnp.float32):
    """x: (B, In) f32; weight: (Out, In) f32 (torch layout); bias: (Out,) f32."""
    B, In = x.shape
    Out, In2 = weight.shape
    assert In == In2, "weight must be (out_features, in_features)"

    # Clamp tiles to the (padded) problem size: sublane multiple of 8 for bm,
    # lane multiples of 128 for bn/bk.
    bm = min(bm, _round_up(B, 8))
    bn = min(bn, _round_up(Out, 128))
    bk = min(bk, _round_up(In, 128))

    # v7x megacore: with a single M block, make sure the (parallel) N axis has
    # at least 2 blocks so both TensorCores are used.
    if _round_up(B, bm) // bm == 1 and _round_up(Out, 128) >= 256:
        bn = min(bn, _round_up(_round_up(Out, 128) // 2, 128))

    Mp, Np, Kp = _round_up(B, bm), _round_up(Out, bn), _round_up(In, bk)

    # Pad + bf16-cast in the wrapper (one fused XLA copy per operand); zero
    # K-padding contributes nothing to the dot.  Weight is transposed once in
    # HBM to (Kp, Np) so the kernel never transposes a tile.
    xp = jnp.pad(x, ((0, Mp - B), (0, Kp - In))).astype(jnp.bfloat16)
    wp = jnp.pad(weight.T, ((0, Kp - In), (0, Np - Out))).astype(jnp.bfloat16)
    bp = jnp.pad(bias, (0, Np - Out)).astype(jnp.float32).reshape(1, Np)
    seed_arr = jnp.asarray([seed], dtype=jnp.int32)

    grid = (Mp // bm, Np // bn, Kp // bk)

    kernel = functools.partial(_dropout_linear_kernel, p=float(p),
                               apply_relu=bool(apply_relu), out_cols=Np)

    flops = 2 * Mp * Np * Kp
    bytes_accessed = (Mp * Kp * 2 * grid[1]       # x re-streamed per N block
                      + Kp * Np * 2 * grid[0]     # W re-streamed per M block
                      + Np * 4 * grid[0]          # bias
                      + Mp * Np * jnp.dtype(out_dtype).itemsize)

    out = pl.pallas_call(
        kernel,
        out_shape=jax.ShapeDtypeStruct((Mp, Np), out_dtype),
        grid_spec=pltpu.PrefetchScalarGridSpec(
            num_scalar_prefetch=1,
            grid=grid,
            in_specs=[
                pl.BlockSpec((bm, bk), lambda i, j, k, seed: (i, k)),   # x tile (bf16)
                pl.BlockSpec((bk, bn), lambda i, j, k, seed: (k, j)),   # W^T tile (bf16)
                pl.BlockSpec((1, bn), lambda i, j, k, seed: (0, j)),    # bias tile
            ],
            out_specs=pl.BlockSpec((bm, bn), lambda i, j, k, seed: (i, j)),
            scratch_shapes=[pltpu.VMEM((bm, bn), jnp.float32)],
        ),
        compiler_params=pltpu.CompilerParams(
            dimension_semantics=("parallel", "parallel", "arbitrary")),
        cost_estimate=pl.CostEstimate(flops=flops, transcendentals=0,
                                      bytes_accessed=int(bytes_accessed)),
    )(seed_arr, xp, wp, bp)

    return out[:B, :Out]


if __name__ == "__main__":
    k1, k2, k3, k4, k5, k6 = jax.random.split(jax.random.PRNGKey(0), 6)

    def reference(x, w, b, p, apply_relu):
        # Same bf16-in / f32-acc matmul as the kernel (dropout mask excluded,
        # survivors scaled by 1/(1-p)).
        y = jnp.dot(x.astype(jnp.bfloat16), w.astype(jnp.bfloat16).T,
                    preferred_element_type=jnp.float32) + b
        y = y * (1.0 / (1.0 - p))
        return jnp.maximum(y, 0.0) if apply_relu else y

    # --- Test 1: module-sized shapes (single tile, wrapper pads to lanes). ---
    B, IN_F, OUT_F, P = 8, 32, 64, 0.5
    bound = 1.0 / (IN_F ** 0.5)
    w = jax.random.uniform(k1, (OUT_F, IN_F), minval=-bound, maxval=bound,
                           dtype=jnp.float32)
    b = jax.random.uniform(k2, (OUT_F,), minval=-bound, maxval=bound,
                           dtype=jnp.float32)
    x = jax.random.normal(k3, (B, IN_F), dtype=jnp.float32)

    out = jax.block_until_ready(dropout_linear(x, w, b, seed=1234, p=P,
                                               apply_relu=True))
    assert out.shape == (B, OUT_F)
    ref = reference(x, w, b, P, True)
    nz = out != 0.0
    ok = jnp.where(nz, jnp.abs(out - ref) <= 1e-2 + 1e-2 * jnp.abs(ref), True)
    assert bool(jnp.all(ok)), "kept elements must equal ReLU((xW^T+b)/(1-p))"
    pos = ref > 1e-3
    frac_dropped = jnp.sum(pos & ~nz) / jnp.maximum(jnp.sum(pos), 1)
    assert 0.2 < float(frac_dropped) < 0.8, "dropout rate far from p"

    # --- Test 2: multi-tile grid (N tiling + K handling + megacore split). ---
    B2, IN2, OUT2, P2 = 64, 384, 512, 0.3
    bound2 = 1.0 / (IN2 ** 0.5)
    w2 = jax.random.uniform(k4, (OUT2, IN2), minval=-bound2, maxval=bound2,
                            dtype=jnp.float32)
    b2 = jax.random.uniform(k5, (OUT2,), minval=-bound2, maxval=bound2,
                            dtype=jnp.float32)
    x2 = jax.random.normal(k6, (B2, IN2), dtype=jnp.float32)

    out2 = jax.block_until_ready(dropout_linear(x2, w2, b2, seed=7, p=P2,
                                                apply_relu=True))
    assert out2.shape == (B2, OUT2)
    ref2 = reference(x2, w2, b2, P2, True)
    nz2 = out2 != 0.0
    ok2 = jnp.where(nz2, jnp.abs(out2 - ref2) <= 1e-2 + 1e-2 * jnp.abs(ref2), True)
    assert bool(jnp.all(ok2))

    print("KERNEL_OK")
</pallas_src>

<mosaic_0001>
module attributes {stable_mosaic.version = 11 : i64} {
  func.func @_dropout_linear_kernel(%arg0: i32, %arg1: i32, %arg2: i32, %arg3: memref<1xi32, #tpu.memory_space<smem>>, %arg4: memref<8x128xbf16, #tpu.memory_space<vmem>>, %arg5: memref<128x128xbf16, #tpu.memory_space<vmem>>, %arg6: memref<1x128xf32, #tpu.memory_space<vmem>>, %arg7: memref<8x128xf32, #tpu.memory_space<vmem>>, %arg8: memref<8x128xf32, #tpu.memory_space<vmem>>) attributes {dimension_semantics = [#tpu.dimension_semantics<parallel>, #tpu.dimension_semantics<parallel>, #tpu.dimension_semantics<arbitrary>], iteration_bounds = array<i64: 1, 1, 1>, scalar_prefetch = 1 : i64, scratch_operands = 1 : i64, tpu.core_type = #tpu.core_type<tc>, window_params = [{transform_indices = @transform_0, window_bounds = array<i64: 8, 128>}, {transform_indices = @transform_1, window_bounds = array<i64: 128, 128>}, {transform_indices = @transform_2, window_bounds = array<i64: 1, 128>}, {transform_indices = @transform_3, window_bounds = array<i64: 8, 128>}]} {
    %c0 = arith.constant 0 : index
    %0 = memref.load %arg3[%c0] : memref<1xi32, #tpu.memory_space<smem>>
    %c8_i32 = arith.constant 8 : i32
    %1 = arith.muli %arg0, %c8_i32 : i32
    %c128_i32 = arith.constant 128 : i32
    %2 = arith.muli %arg1, %c128_i32 : i32
    %c0_i32 = arith.constant 0 : i32
    %3 = arith.cmpi eq, %arg2, %c0_i32 : i32
    %4 = arith.extui %3 : i1 to i32
    %c0_i32_0 = arith.constant 0 : i32
    %5 = arith.cmpi ne, %4, %c0_i32_0 : i32
    scf.if %5 {
      %cst_11 = arith.constant 0.000000e+00 : f32
      %15 = vector.broadcast %cst_11 : f32 to vector<8x128xf32>
      %c0_12 = arith.constant 0 : index
      %c0_13 = arith.constant 0 : index
      %16 = vector.load %arg8[%c0_12, %c0_13] : memref<8x128xf32, #tpu.memory_space<vmem>>, vector<8x128xf32>
      tpu.vector_store %arg8[%c0_12, %c0_13], %15 {strides = array<i32>} : memref<8x128xf32, #tpu.memory_space<vmem>>, vector<8x128xf32>,
    } else {
    }
    %c0_1 = arith.constant 0 : index
    %c0_2 = arith.constant 0 : index
    %6 = vector.load %arg8[%c0_1, %c0_2] : memref<8x128xf32, #tpu.memory_space<vmem>>, vector<8x128xf32>
    %c0_3 = arith.constant 0 : index
    %c0_4 = arith.constant 0 : index
    %7 = vector.load %arg4[%c0_3, %c0_4] : memref<8x128xbf16, #tpu.memory_space<vmem>>, vector<8x128xbf16>
    %c0_5 = arith.constant 0 : index
    %c0_6 = arith.constant 0 : index
    %8 = vector.load %arg5[%c0_5, %c0_6] : memref<128x128xbf16, #tpu.memory_space<vmem>>, vector<128x128xbf16>
    %cst = arith.constant dense<0.000000e+00> : vector<8x128xf32>
    %9 = tpu.matmul %7, %8, %cst {dimension_numbers = #tpu.dot_dimension_numbers<[1], [0], [0], [1], [0, 0, 1, 1], [], []>} : vector<8x128xbf16>, vector<128x128xbf16>, vector<8x128xf32> -> vector<8x128xf32>
    %10 = arith.addf %6, %9 : vector<8x128xf32>
    %c0_7 = arith.constant 0 : index
    %c0_8 = arith.constant 0 : index
    %11 = vector.load %arg8[%c0_7, %c0_8] : memref<8x128xf32, #tpu.memory_space<vmem>>, vector<8x128xf32>
    tpu.vector_store %arg8[%c0_7, %c0_8], %10 {strides = array<i32>} : memref<8x128xf32, #tpu.memory_space<vmem>>, vector<8x128xf32>,
    %c0_i32_9 = arith.constant 0 : i32
    %12 = arith.cmpi eq, %arg2, %c0_i32_9 : i32
    %13 = arith.extui %12 : i1 to i32
    %c0_i32_10 = arith.constant 0 : i32
    %14 = arith.cmpi ne, %13, %c0_i32_10 : i32
    scf.if %14 {
      %c0_11 = arith.constant 0 : index
      %c0_12 = arith.constant 0 : index
      %15 = vector.load %arg8[%c0_11, %c0_12] : memref<8x128xf32, #tpu.memory_space<vmem>>, vector<8x128xf32>
      %c0_13 = arith.constant 0 : index
      %c0_14 = arith.constant 0 : index
      %16 = vector.load %arg6[%c0_13, %c0_14] : memref<1x128xf32, #tpu.memory_space<vmem>>, vector<1x128xf32>
      %17 = vector.broadcast %16 : vector<1x128xf32> to vector<8x128xf32>
      %18 = arith.addf %15, %17 : vector<8x128xf32>
      %19 = tpu.iota {dimensions = array<i32: 0>} : vector<8x1xi32>
      %20 = vector.broadcast %1 : i32 to vector<8x1xi32>
      %21 = arith.addi %20, %19 : vector<8x1xi32>
      %22 = tpu.iota {dimensions = array<i32: 1>} : vector<1x128xi32>
      %23 = vector.broadcast %2 : i32 to vector<1x128xi32>
      %24 = arith.addi %23, %22 : vector<1x128xi32>
      %c128_i32_15 = arith.constant 128 : i32
      %25 = vector.broadcast %c128_i32_15 : i32 to vector<8x1xi32>
      %26 = arith.muli %21, %25 : vector<8x1xi32>
      %27 = vector.broadcast %26 : vector<8x1xi32> to vector<8x128xi32>
      %28 = vector.broadcast %24 : vector<1x128xi32> to vector<8x128xi32>
      %29 = arith.addi %27, %28 : vector<8x128xi32>
      %c-1640531527_i32 = arith.constant -1640531527 : i32
      %30 = arith.muli %0, %c-1640531527_i32 : i32
      %31 = vector.broadcast %30 : i32 to vector<8x128xi32>
      %32 = arith.xori %29, %31 : vector<8x128xi32>
      %c16_i32 = arith.constant 16 : i32
      %33 = vector.broadcast %c16_i32 : i32 to vector<8x128xi32>
      %34 = arith.shrui %32, %33 : vector<8x128xi32>
      %35 = arith.xori %32, %34 : vector<8x128xi32>
      %c2146121005_i32 = arith.constant 2146121005 : i32
      %36 = vector.broadcast %c2146121005_i32 : i32 to vector<8x128xi32>
      %37 = arith.muli %35, %36 : vector<8x128xi32>
      %c15_i32 = arith.constant 15 : i32
      %38 = vector.broadcast %c15_i32 : i32 to vector<8x128xi32>
      %39 = arith.shrui %37, %38 : vector<8x128xi32>
      %40 = arith.xori %37, %39 : vector<8x128xi32>
      %c-2073254261_i32 = arith.constant -2073254261 : i32
      %41 = vector.broadcast %c-2073254261_i32 : i32 to vector<8x128xi32>
      %42 = arith.muli %40, %41 : vector<8x128xi32>
      %c16_i32_16 = arith.constant 16 : i32
      %43 = vector.broadcast %c16_i32_16 : i32 to vector<8x128xi32>
      %44 = arith.shrui %42, %43 : vector<8x128xi32>
      %45 = arith.xori %42, %44 : vector<8x128xi32>
      %c8_i32_17 = arith.constant 8 : i32
      %46 = vector.broadcast %c8_i32_17 : i32 to vector<8x128xi32>
      %47 = arith.shrui %45, %46 : vector<8x128xi32>
      %c8388608_i32 = arith.constant 8388608 : i32
      %48 = vector.broadcast %c8388608_i32 : i32 to vector<8x128xi32>
      %49 = arith.cmpi sge, %47, %48 : vector<8x128xi32>
      %cst_18 = arith.constant 2.000000e+00 : f32
      %cst_19 = arith.constant 0.000000e+00 : f32
      %50 = vector.broadcast %cst_18 : f32 to vector<8x128xf32>
      %51 = vector.broadcast %cst_19 : f32 to vector<8x128xf32>
      %52 = arith.select %49, %50, %51 : vector<8x128xi1>, vector<8x128xf32>
      %53 = arith.mulf %18, %52 : vector<8x128xf32>
      %cst_20 = arith.constant 0.000000e+00 : f32
      %54 = vector.broadcast %cst_20 : f32 to vector<8x128xf32>
      %55 = arith.maximumf %53, %54 : vector<8x128xf32>
      %c0_21 = arith.constant 0 : index
      %c0_22 = arith.constant 0 : index
      %56 = vector.load %arg7[%c0_21, %c0_22] : memref<8x128xf32, #tpu.memory_space<vmem>>, vector<8x128xf32>
      tpu.vector_store %arg7[%c0_21, %c0_22], %55 {strides = array<i32>} : memref<8x128xf32, #tpu.memory_space<vmem>>, vector<8x128xf32>,
    } else {
    }
    return
  }
  func.func @transform_0(%arg0: i32, %arg1: i32, %arg2: i32, %arg3: memref<1xi32, #tpu.memory_space<smem>>) -> (i32, i32) {
    %c0_i32 = arith.constant 0 : i32
    return %arg0, %arg2 : i32, i32
  }
  func.func @transform_1(%arg0: i32, %arg1: i32, %arg2: i32, %arg3: memref<1xi32, #tpu.memory_space<smem>>) -> (i32, i32) {
    %c0_i32 = arith.constant 0 : i32
    return %arg2, %arg1 : i32, i32
  }
  func.func @transform_2(%arg0: i32, %arg1: i32, %arg2: i32, %arg3: memref<1xi32, #tpu.memory_space<smem>>) -> (i32, i32) {
    %c0_i32 = arith.constant 0 : i32
    %c0_i32_0 = arith.constant 0 : i32
    return %c0_i32, %arg1 : i32, i32
  }
  func.func @transform_3(%arg0: i32, %arg1: i32, %arg2: i32, %arg3: memref<1xi32, #tpu.memory_space<smem>>) -> (i32, i32) {
    %c0_i32 = arith.constant 0 : i32
    return %arg0, %arg1 : i32, i32
  }
}

</mosaic_0001>

<llo_original>
// kernel: tpu_custom_call.1
$region0: #{tpu_custom_call.1}
  #allocation0 [shape = 'u32[]', space=smem, size = 0x4, offset = 0x4, fixed_abs, tag = 'smem constant byte address 0x4 - core index']
  #allocation1 [shape = 'u32[144,128]{1,0:T(1,128)}', space=vmem, size = 0x12000, scoped, tag = 'internal scratch']
  #allocation2 [shape = 'f32[8,128]{1,0:T(8,128)}', space=vmem, size = 0x1000, scoped, tag = 'scratch operand']
  #allocation3 [shape = 's32[1]{0}', space=sflag, size = 0x4, scoped, tag = 'scoped memory for tpu_custom_call.1']
  #allocation4 [shape = 's32[1]{0:T(128)S(6)}', space=smem, size = 0x200, scoped, tag = 'prefetched SMEM operand 0']
  %s0 = inlined_call_operand.<no memory space> [shape: s32[1], index: 0, kind: input, shape index: {}]
  %s1 = inlined_call_operand.hbm [shape: bf16[8,128], index: 1, kind: input, shape index: {}]
  %s2 = inlined_call_operand.hbm [shape: bf16[128,128], index: 2, kind: input, shape index: {}]
  %s3 = inlined_call_operand.vmem [shape: f32[1,128], index: 3, kind: input, shape index: {}]
  %s4 = inlined_call_operand.hbm [shape: f32[8,128], index: 4, kind: output, shape index: {}]
  %s5 = sld [smem:[#allocation0]]
  $region38: #{tpu_custom_call.1} parent=0
    _
  %s7 = ssub.s32 1, %s5
  %s8 = scalar_select 0, %s7, %s5
  %9 = sst [smem:[#allocation4]] %s0
  $region1: #{tpu_custom_call.1} parent=0
    #allocation5 [shape = 'u8[2048]{0}', space=vmem, size = 0x800, scoped, tag = 'input window, operand 1, single buffered']
    #allocation6 [shape = 's32[1]{0}', space=sflag, size = 0x4, scoped, tag = 'scoped memory for tpu_custom_call.1']
    #allocation7 [shape = 's32[1]{0}', space=sflag, size = 0x4, scoped, tag = 'scoped memory for tpu_custom_call.1']
    #allocation8 [shape = 'u8[32768]{0}', space=vmem, size = 0x8000, scoped, tag = 'input window, operand 2, single buffered']
    #allocation9 [shape = 's32[1]{0}', space=sflag, size = 0x4, scoped, tag = 'scoped memory for tpu_custom_call.1']
    #allocation10 [shape = 'u8[4096]{0}', space=vmem, size = 0x1000, scoped, tag = 'output window, operand 0, single buffered']
    %10 = vsyncpa [#allocation6], 0
    %11 = vsyncpa [#allocation9], 0
    %12 = vsyncpa [#allocation7], 0
    // Predicated region
    $region2: #{tpu_custom_call.1} parent=1 // pred_check
      _
    $region3: #{tpu_custom_call.1} parent=1 // pred_check_branch
      %14 = sbr.rel (0) target = $region5
    $region4: #{tpu_custom_call.1} parent=1 // pred_region
      %s16 = ssub.s32 64, 64
      %17 = vsyncadd [#allocation6], %s16
      %s19 = sshll.u32 [#allocation5], 4
      %s20 = int_to_ptr.vmem [resolvable:$true] %s19
      %22 = dma.hbm_to_vmem [thread:$0]  %s1, 64, %s20, [#allocation6]
    $region5: #{tpu_custom_call.1} parent=1 // pred_fallthru
      _
    // Predicated region
    $region6: #{tpu_custom_call.1} parent=1 // pred_check
      _
    $region7: #{tpu_custom_call.1} parent=1 // pred_check_branch
      %24 = sbr.rel (0) target = $region9
    $region8: #{tpu_custom_call.1} parent=1 // pred_region
      %s26 = ssub.s32 1024, 1024
      %27 = vsyncadd [#allocation9], %s26
      %s28 = sshll.u32 [#allocation8], 4
      %s29 = int_to_ptr.vmem [resolvable:$true] %s28
      %34 = dma.hbm_to_vmem [thread:$0]  %s2, 1024, %s29, [#allocation9], 64, 64, 4
    $region9: #{tpu_custom_call.1} parent=1 // pred_fallthru
      _
    // Predicated region
    $region10: #{tpu_custom_call.1} parent=1 // pred_check
      _
    $region11: #{tpu_custom_call.1} parent=1 // pred_check_branch
      %36 = sbr.rel (0) target = $region13
    $region12: #{tpu_custom_call.1} parent=1 // pred_region
      _
    $region13: #{tpu_custom_call.1} parent=1 // pred_fallthru
      _
    // Predicated region
    $region14: #{tpu_custom_call.1} parent=1 // pred_check
      _
    $region15: #{tpu_custom_call.1} parent=1 // pred_check_branch
      %38 = sbr.rel (0) target = $region17
    $region16: #{tpu_custom_call.1} parent=1 // pred_region
      %39 = dma.done [#allocation6], 64
    $region17: #{tpu_custom_call.1} parent=1 // pred_fallthru
      _
    // Predicated region
    $region18: #{tpu_custom_call.1} parent=1 // pred_check
      _
    $region19: #{tpu_custom_call.1} parent=1 // pred_check_branch
      %41 = sbr.rel (0) target = $region21
    $region20: #{tpu_custom_call.1} parent=1 // pred_region
      %42 = dma.done [#allocation9], 1024
    $region21: #{tpu_custom_call.1} parent=1 // pred_fallthru
      _
    %s44 = sld [smem:[#allocation4]]
    %s45 = smul.u32 0, 8
    %s46 = smul.u32 0, 128
    %p47 = scmp.eq.s32.totalorder 0, 0
    // Predicated region
    $region22: #{tpu_custom_call.1} parent=1 // pred_check
      %p48 = pneg %p47
    $region23: #{tpu_custom_call.1} parent=1 // pred_check_branch
      %50 = sbr.rel (%p48) target = $region25
    $region24: #{tpu_custom_call.1} parent=1 // pred_region
      %51 = vst [vmem:[#allocation2] sm:$0xff] 0.0
    $region25: #{tpu_custom_call.1} parent=1 // pred_fallthru
      _
    %v52 = vld [vmem:[#allocation2] sm:$0xff]
    %v53 = vld [vmem:[#allocation5] sm:$0xf]
    %v54 = vld [vmem:[#allocation8] sm:$0xf]
    %v55 = vld [vmem:[#allocation8 + $0x4] sm:$0xf]
    %v56 = vld [vmem:[#allocation8 + $0x8] sm:$0xf]
    %v57 = vld [vmem:[#allocation8 + $0xc] sm:$0xf]
    %v58 = vld [vmem:[#allocation8 + $0x10] sm:$0xf]
    %v59 = vld [vmem:[#allocation8 + $0x14] sm:$0xf]
    %v60 = vld [vmem:[#allocation8 + $0x18] sm:$0xf]
    %v61 = vld [vmem:[#allocation8 + $0x1c] sm:$0xf]
    %v62 = vld [vmem:[#allocation8 + $0x20] sm:$0xf]
    %v63 = vld [vmem:[#allocation8 + $0x24] sm:$0xf]
    %v64 = vld [vmem:[#allocation8 + $0x28] sm:$0xf]
    %v65 = vld [vmem:[#allocation8 + $0x2c] sm:$0xf]
    %v66 = vld [vmem:[#allocation8 + $0x30] sm:$0xf]
    %v67 = vld [vmem:[#allocation8 + $0x34] sm:$0xf]
    %v68 = vld [vmem:[#allocation8 + $0x38] sm:$0xf]
    %v69 = vld [vmem:[#allocation8 + $0x3c] sm:$0xf]
    %v86 = vunpack.c.l.b16 %v54
    %v87 = vunpack.c.l.b16 %v55
    %v88 = vunpack.c.l.b16 %v56
    %v89 = vunpack.c.l.b16 %v57
    %v90 = vunpack.c.l.b16 %v58
    %v91 = vunpack.c.l.b16 %v59
    %v92 = vunpack.c.l.b16 %v60
    %v93 = vunpack.c.l.b16 %v61
    %v94 = vunpack.c.l.b16 %v62
    %v95 = vunpack.c.l.b16 %v63
    %v96 = vunpack.c.l.b16 %v64
    %v97 = vunpack.c.l.b16 %v65
    %v98 = vunpack.c.l.b16 %v66
    %v99 = vunpack.c.l.b16 %v67
    %v100 = vunpack.c.l.b16 %v68
    %v101 = vunpack.c.l.b16 %v69
    %v102 = vpack.c.b16 %v87, %v86
    %v103 = vpack.c.b16 %v89, %v88
    %v104 = vpack.c.b16 %v91, %v90
    %v105 = vpack.c.b16 %v93, %v92
    %v106 = vpack.c.b16 %v95, %v94
    %v107 = vpack.c.b16 %v97, %v96
    %v108 = vpack.c.b16 %v99, %v98
    %v109 = vpack.c.b16 %v101, %v100
    %118 = vmatprep.subr.bf16.mxu0 0
    %119 = vmatpush1.bf16.msra.mxu0 %v102
    %120 = vmatprep.subr.bf16.mxu0 0
    %121 = vmatpush1.bf16.msra.mxu0 %v103
    %122 = vmatprep.subr.bf16.mxu0 0
    %123 = vmatpush1.bf16.msra.mxu0 %v104
    %124 = vmatprep.subr.bf16.mxu0 0
    %125 = vmatpush1.bf16.msra.mxu0 %v105
    %126 = vmatprep.subr.bf16.mxu0 0
    %127 = vmatpush1.bf16.msra.mxu0 %v106
    %128 = vmatprep.subr.bf16.mxu0 0
    %129 = vmatpush1.bf16.msra.mxu0 %v107
    %130 = vmatprep.subr.bf16.mxu0 0
    %131 = vmatpush1.bf16.msra.mxu0 %v108
    %132 = vmatprep.subr.bf16.mxu0 0
    %133 = vmatpush1.bf16.msra.mxu0 %v109
    %134 = vmatprep.subr.bf16.mxu0 0
    %135 = vmatpush1.bf16.msra.mxu0 0
    %136 = vmatprep.subr.bf16.mxu0 0
    %137 = vmatpush1.bf16.msra.mxu0 0
    %138 = vmatprep.subr.bf16.mxu0 0
    %139 = vmatpush1.bf16.msra.mxu0 0
    %140 = vmatprep.subr.bf16.mxu0 0
    %141 = vmatpush1.bf16.msra.mxu0 0
    %142 = vmatprep.subr.bf16.mxu0 0
    %143 = vmatpush1.bf16.msra.mxu0 0
    %144 = vmatprep.subr.bf16.mxu0 0
    %145 = vmatpush1.bf16.msra.mxu0 0
    %146 = vmatprep.subr.bf16.mxu0 0
    %147 = vmatpush1.bf16.msra.mxu0 0
    %148 = vmatprep.subr.bf16.mxu0 0
    %149 = vmatpush1.bf16.msra.mxu0 0
    %150 = vmatprep.mubr.bf16.mxu0 0
    %151 = vmatmul.mubr.bf16.gmra.mrb[0].mxu0 %v53
    %v152 = vpop.f32.mrb[0].mxu0
    %v153 = vadd.f32 0.0, %v152
    %v154 = vpop.f32.mrb[0].mxu0
    %v155 = vpop.f32.mrb[0].mxu0
    %v156 = vpop.f32.mrb[0].mxu0
    %157 = vdwg.mxu0
    %v158 = vadd.f32 %v52, %v153
    %159 = vst [vmem:[#allocation2] sm:$0xff] %v158
    // Predicated region
    $region26: #{tpu_custom_call.1} parent=1 // pred_check
      %p160 = pneg %p47
    $region27: #{tpu_custom_call.1} parent=1 // pred_check_branch
      %162 = sbr.rel (%p160) target = $region29
    $region28: #{tpu_custom_call.1} parent=1 // pred_region
      %v163 = vld [vmem:[#allocation2] sm:$0xff]
      %v164 = vld [vmem:[%s3] sm:$0x1]
      %v166 = vlaneseq
      %v167 = vshrl.u32 %v166, 7
      %v168 = vsub.s32 0, %v167
      %v169 = vrot.slane %v164, %v168
      %v171 = vadd.f32 %v163, %v169
      %v172 = vlaneseq
      %v173 = vshrl.u32 %v172, 7
      %v174 = vstv %s45
      %v175 = vadd.s32 %v174, %v173
      %v176 = vlaneseq
      %v177 = vand.u32 %v176, 127
      %v178 = vstv %s46
      %v179 = vadd.s32 %v178, %v177
      %v180 = vmul.u32 %v175, 128
      %v181 = vadd.s32 %v180, %v179
      %s182 = smul.u32 %s44, 2654435769
      %v183 = vstv %s182
      %v184 = vxor.u32 %v181, %v183
      %v185 = vshrl.u32 %v184, 16
      %v186 = vxor.u32 %v184, %v185
      %v187 = vmul.u32 %v186, 2146121005
      %v188 = vshrl.u32 %v187, 15
      %v189 = vxor.u32 %v187, %v188
      %v190 = vmul.u32 %v189, 2221713035
      %v191 = vshrl.u32 %v190, 16
      %v192 = vxor.u32 %v190, %v191
      %v193 = vshrl.u32 %v192, 8
      %vm194 = vcmp.ge.s32.totalorder %v193, 8388608
      %v195 = vsel %vm194, 2.0, 0.0
      %v196 = vmul.f32 %v171, %v195
      %v197 = vmax.f32 %v196, 0.0
      %198 = vst [vmem:[#allocation10] sm:$0xff] %v197
    $region29: #{tpu_custom_call.1} parent=1 // pred_fallthru
      _
    // Predicated region
    $region30: #{tpu_custom_call.1} parent=1 // pred_check
      _
    $region31: #{tpu_custom_call.1} parent=1 // pred_check_branch
      %200 = sbr.rel (0) target = $region33
    $region32: #{tpu_custom_call.1} parent=1 // pred_region
      %s202 = ssub.s32 128, 128
      %203 = vsyncadd [#allocation7], %s202
      %s205 = sshll.u32 [#allocation10], 4
      %s206 = int_to_ptr.vmem [resolvable:$true] %s205
      %208 = dma.vmem_to_hbm [thread:$0]  %s206, 128, %s4, [#allocation7]
    $region33: #{tpu_custom_call.1} parent=1 // pred_fallthru
      _
    // Predicated region
    $region34: #{tpu_custom_call.1} parent=1 // pred_check
      _
    $region35: #{tpu_custom_call.1} parent=1 // pred_check_branch
      %210 = sbr.rel (0) target = $region37
    $region36: #{tpu_custom_call.1} parent=1 // pred_region
      %211 = dma.done [#allocation7], 128
    $region37: #{tpu_custom_call.1} parent=1 // pred_fallthru
      _
    %212 = vsyncpa [#allocation6], 1
    %213 = vsyncpa [#allocation9], 1
    %214 = vsyncpa [#allocation7], 1

</llo_original>
